<compile_context>
chip_gen: v7x
topology: tpu7x:2x2x1
jax: 0.10.0
libtpu: 0.0.40
codegen_flags: <defaults>
</compile_context>

<pallas_src>
import math
from functools import partial

import jax
import jax.numpy as jnp
import numpy as np
from jax.experimental import pallas as pl
from jax.experimental.pallas import tpu as pltpu


def _round_up(x: int, m: int) -> int:
    return ((x + m - 1) // m) * m


# ---------------------------------------------------------------------------
# Kernel: o = fields_flat @ Wf + sequence @ Ws + b   (one MXU pass per tile)
#   f_ref : (tm, Fs*FdC)    compute dtype
#   s_ref : (tm, FdC)       compute dtype
#   wf_ref: (Fs*FdC, T_pad) compute dtype (block-diagonal over fields)
#   ws_ref: (FdC,    T_pad) compute dtype (shared sequence half)
#   b_ref : (1,      T_pad) float32
#   o_ref : (tm,     T_pad) out dtype (lane-dense: T_pad % 128 == 0)
# ---------------------------------------------------------------------------
def _fused_decoder_kernel(f_ref, s_ref, wf_ref, ws_ref, b_ref, o_ref):
    acc = jnp.dot(f_ref[...], wf_ref[...], preferred_element_type=jnp.float32)
    acc = acc + jnp.dot(s_ref[...], ws_ref[...], preferred_element_type=jnp.float32)
    o_ref[...] = (acc + b_ref[...]).astype(o_ref.dtype)


def _fused_projection(f, s, wf, ws, b, *, tm, out_dtype):
    """f: (N_pad, Kf), s: (N_pad, Ks), wf: (Kf, T_pad), ws: (Ks, T_pad), b: (1, T_pad)."""
    n_pad, kf = f.shape
    ks = s.shape[1]
    t_pad = wf.shape[1]
    grid = (n_pad // tm,)

    in_b = jnp.dtype(f.dtype).itemsize
    w_b = jnp.dtype(wf.dtype).itemsize
    out_b = jnp.dtype(out_dtype).itemsize
    # Double-buffered row tiles (inputs/output) + (conservatively counted as
    # double-buffered) resident weight/bias blocks.
    needed = (2 * tm * (kf + ks) * in_b
              + 2 * tm * t_pad * out_b
              + 2 * (kf + ks) * t_pad * w_b
              + 2 * t_pad * 4)
    vmem_limit = int(max(16 << 20, min(64 << 20, needed * 5 // 4 + (4 << 20))))

    return pl.pallas_call(
        _fused_decoder_kernel,
        out_shape=jax.ShapeDtypeStruct((n_pad, t_pad), out_dtype),
        grid_spec=pltpu.PrefetchScalarGridSpec(
            num_scalar_prefetch=0,
            grid=grid,
            in_specs=[
                pl.BlockSpec((tm, kf), lambda i: (i, 0)),      # row-tiled fields
                pl.BlockSpec((tm, ks), lambda i: (i, 0)),      # row-tiled sequence
                pl.BlockSpec((kf, t_pad), lambda i: (0, 0)),   # resident weights
                pl.BlockSpec((ks, t_pad), lambda i: (0, 0)),   # resident weights
                pl.BlockSpec((1, t_pad), lambda i: (0, 0)),    # resident bias
            ],
            out_specs=pl.BlockSpec((tm, t_pad), lambda i: (i, 0)),
        ),
        compiler_params=pltpu.CompilerParams(
            dimension_semantics=("parallel",),   # rows shard across TCs on v7x
            vmem_limit_bytes=vmem_limit,
        ),
    )(f, s, wf, ws, b)


def _choose_tiling(n, kf, ks, t_pad, compute_dtype, out_dtype):
    """Pick (tm, n_pad) from a conservative VMEM budget; >=4 grid steps for large N."""
    in_b = jnp.dtype(compute_dtype).itemsize
    out_b = jnp.dtype(out_dtype).itemsize
    n8 = _round_up(max(n, 8), 8)
    row_bytes = 2 * (kf + ks) * in_b + 2 * t_pad * out_b      # per-row pipelined bytes
    fixed = 2 * (kf + ks) * t_pad * in_b + 2 * t_pad * 4      # resident weights + bias
    budget = 24 << 20                                         # safe on v5e/v6e/v7x
    avail = max(budget - fixed, 8 * row_bytes)
    max_tm = max(8, min(512, (avail // row_bytes) // 8 * 8))
    if n8 <= 256:
        tm = min(n8, max_tm)                                  # tiny N: single block
    else:
        # >= 4 grid steps so v7x's two TensorCores each get >= 2 pipelined steps,
        # with tail padding limited to a few multiples of 8 rows.
        g = max(4, pl.cdiv(n8, max_tm))
        tm = min(max_tm, _round_up(pl.cdiv(n8, g), 8))
    n_pad = _round_up(n8, tm)
    return tm, n_pad


# ---------------------------------------------------------------------------
# Decoder factory: packs weights once, returns a dict-producing `decode`
# (spec semantics) plus `decode.packed` for the lane-dense slab path.
# Per-field weights are stored as (in_features, out_features) = (2*FdC, T_i),
# i.e. the transpose of PyTorch's Linear.weight, so the math is x @ W + b.
# ---------------------------------------------------------------------------
def make_static_field_decoder(field_specs, d_fdc, weights, biases, *,
                              compute_dtype=jnp.bfloat16, out_dtype=jnp.float32):
    names = tuple(n for n, _ in field_specs)
    targets = tuple(int(t) for _, t in field_specs)
    fs = len(field_specs)

    offsets, off = [], 0
    for t in targets:
        offsets.append(off)
        off += t
    t_sum = off
    t_pad = max(128, _round_up(t_sum, 128))   # lane-dense output slab
    kf, ks = fs * d_fdc, d_fdc

    # One-shot, host-side weight packing (hoisted out of the per-call path).
    wf_np = np.zeros((kf, t_pad), np.float32)
    ws_np = np.zeros((ks, t_pad), np.float32)
    b_np = np.zeros((1, t_pad), np.float32)
    for i in range(fs):
        o, t = offsets[i], targets[i]
        w_i = np.asarray(weights[i], np.float32)               # (2*FdC, T_i)
        wf_np[i * d_fdc:(i + 1) * d_fdc, o:o + t] = w_i[:d_fdc]   # fields half
        ws_np[:, o:o + t] = w_i[d_fdc:]                           # sequence half
        b_np[0, o:o + t] = np.asarray(biases[i], np.float32)
    wf = jnp.asarray(wf_np, compute_dtype)
    ws = jnp.asarray(ws_np, compute_dtype)
    b = jnp.asarray(b_np, jnp.float32)

    @partial(jax.jit, static_argnames=("tm", "n_pad"))
    def _run(fields, sequence, wf, ws, b, *, tm, n_pad):
        n = fields.shape[0]
        f = fields.reshape(n, kf).astype(compute_dtype)   # free view + fused cast
        s = sequence.astype(compute_dtype)
        if n_pad != n:
            f = jnp.pad(f, ((0, n_pad - n), (0, 0)))
            s = jnp.pad(s, ((0, n_pad - n), (0, 0)))
        out = _fused_projection(f, s, wf, ws, b, tm=tm, out_dtype=out_dtype)
        return out[:n]                                    # lane-dense (N, T_pad) slab

    def decode_packed(fields, sequence):
        n = fields.shape[0]
        tm, n_pad = _choose_tiling(n, kf, ks, t_pad, compute_dtype, out_dtype)
        return _run(fields, sequence, wf, ws, b, tm=tm, n_pad=n_pad)

    def decode(fields, sequence):
        # Spec-compatible dict API; hot-path consumers should prefer
        # decode.packed + decode.offsets to keep the output lane-dense.
        slab = decode_packed(fields, sequence)
        return {name: slab[:, offsets[i]:offsets[i] + targets[i]]
                for i, name in enumerate(names)}

    decode.packed = decode_packed
    decode.offsets = dict(zip(names, zip(offsets, targets)))
    return decode


# ---------------------------------------------------------------------------
# Deterministic parameter initialization (mimics torch.nn.Linear default init)
# ---------------------------------------------------------------------------
def init_params(key, static_field_targets, in_features):
    weights, biases = [], []
    bound = 1.0 / math.sqrt(in_features)
    for i, (_, tgt) in enumerate(static_field_targets):
        k_w, k_b = jax.random.split(jax.random.fold_in(key, i))
        weights.append(
            jax.random.uniform(k_w, (in_features, tgt), jnp.float32, -bound, bound)
        )
        biases.append(
            jax.random.uniform(k_b, (tgt,), jnp.float32, -bound, bound)
        )
    return tuple(weights), tuple(biases)


if __name__ == "__main__":
    # Small, module-consistent shapes:
    #   N = 8 samples, Fs = 3 static fields, 2 dynamic fields, d_field = 8
    #   => FdC = len(dynamic) * d_field = 16, Linear in_features = 2*FdC = 32
    N = 8
    FdC = 16
    in_features = 2 * FdC
    static_field_targets = (("status", 7), ("segment", 12), ("tier", 5))
    Fs = len(static_field_targets)

    key = jax.random.PRNGKey(0)
    k_fields, k_seq, k_params = jax.random.split(key, 3)

    fields = jax.random.normal(k_fields, (N, Fs, FdC), jnp.float32)
    sequence = jax.random.normal(k_seq, (N, FdC), jnp.float32)
    weights, biases = init_params(k_params, static_field_targets, in_features)

    decoder = make_static_field_decoder(
        static_field_targets, FdC, weights, biases,
        compute_dtype=jnp.bfloat16, out_dtype=jnp.float32,
    )
    out = decoder(fields, sequence)
    out = jax.block_until_ready(out)

    # Reference check against plain JAX with the same bf16 input/weight casts
    # (kernel accumulates in f32 on the MXU; bias stays f32).
    ok = True
    cd = jnp.bfloat16
    for i, (name, tgt) in enumerate(static_field_targets):
        x = jnp.concatenate([fields[:, i, :], sequence], axis=1)
        x = x.astype(cd).astype(jnp.float32)
        w = weights[i].astype(cd).astype(jnp.float32)
        ref = x @ w + biases[i]
        ok &= bool(jnp.allclose(out[name], ref, atol=2e-3, rtol=2e-3))
        ok &= out[name].shape == (N, tgt)

    if ok:
        print("KERNEL_OK")
</pallas_src>

<mosaic_0001>
module attributes {stable_mosaic.version = 11 : i64} {
  func.func @_fused_decoder_kernel(%arg0: i32, %arg1: memref<8x48xbf16, #tpu.memory_space<vmem>>, %arg2: memref<8x16xbf16, #tpu.memory_space<vmem>>, %arg3: memref<48x128xbf16, #tpu.memory_space<vmem>>, %arg4: memref<16x128xbf16, #tpu.memory_space<vmem>>, %arg5: memref<1x128xf32, #tpu.memory_space<vmem>>, %arg6: memref<8x128xf32, #tpu.memory_space<vmem>>) attributes {dimension_semantics = [#tpu.dimension_semantics<parallel>], iteration_bounds = array<i64: 1>, scalar_prefetch = 0 : i64, scratch_operands = 0 : i64, tpu.core_type = #tpu.core_type<tc>, window_params = [{transform_indices = @transform_0, window_bounds = array<i64: 8, 48>}, {transform_indices = @transform_1, window_bounds = array<i64: 8, 16>}, {pipeline_mode = #tpu.pipeline_mode<synchronous>, transform_indices = @transform_2, window_bounds = array<i64: 48, 128>}, {pipeline_mode = #tpu.pipeline_mode<synchronous>, transform_indices = @transform_3, window_bounds = array<i64: 16, 128>}, {pipeline_mode = #tpu.pipeline_mode<synchronous>, transform_indices = @transform_4, window_bounds = array<i64: 1, 128>}, {transform_indices = @transform_5, window_bounds = array<i64: 8, 128>}]} {
    %c0 = arith.constant 0 : index
    %c0_0 = arith.constant 0 : index
    %0 = vector.load %arg1[%c0, %c0_0] : memref<8x48xbf16, #tpu.memory_space<vmem>>, vector<8x48xbf16>
    %c0_1 = arith.constant 0 : index
    %c0_2 = arith.constant 0 : index
    %1 = vector.load %arg3[%c0_1, %c0_2] : memref<48x128xbf16, #tpu.memory_space<vmem>>, vector<48x128xbf16>
    %cst = arith.constant dense<0.000000e+00> : vector<8x128xf32>
    %2 = tpu.matmul %0, %1, %cst {dimension_numbers = #tpu.dot_dimension_numbers<[1], [0], [0], [1], [0, 0, 1, 1], [], []>} : vector<8x48xbf16>, vector<48x128xbf16>, vector<8x128xf32> -> vector<8x128xf32>
    %c0_3 = arith.constant 0 : index
    %c0_4 = arith.constant 0 : index
    %3 = vector.load %arg2[%c0_3, %c0_4] : memref<8x16xbf16, #tpu.memory_space<vmem>>, vector<8x16xbf16>
    %c0_5 = arith.constant 0 : index
    %c0_6 = arith.constant 0 : index
    %4 = vector.load %arg4[%c0_5, %c0_6] : memref<16x128xbf16, #tpu.memory_space<vmem>>, vector<16x128xbf16>
    %cst_7 = arith.constant dense<0.000000e+00> : vector<8x128xf32>
    %5 = tpu.matmul %3, %4, %cst_7 {dimension_numbers = #tpu.dot_dimension_numbers<[1], [0], [0], [1], [0, 0, 1, 1], [], []>} : vector<8x16xbf16>, vector<16x128xbf16>, vector<8x128xf32> -> vector<8x128xf32>
    %6 = arith.addf %2, %5 : vector<8x128xf32>
    %c0_8 = arith.constant 0 : index
    %c0_9 = arith.constant 0 : index
    %7 = vector.load %arg5[%c0_8, %c0_9] : memref<1x128xf32, #tpu.memory_space<vmem>>, vector<1x128xf32>
    %8 = vector.broadcast %7 : vector<1x128xf32> to vector<8x128xf32>
    %9 = arith.addf %6, %8 : vector<8x128xf32>
    %c0_10 = arith.constant 0 : index
    %c0_11 = arith.constant 0 : index
    %10 = vector.load %arg6[%c0_10, %c0_11] : memref<8x128xf32, #tpu.memory_space<vmem>>, vector<8x128xf32>
    tpu.vector_store %arg6[%c0_10, %c0_11], %9 {strides = array<i32>} : memref<8x128xf32, #tpu.memory_space<vmem>>, vector<8x128xf32>,
    return
  }
  func.func @transform_0(%arg0: i32) -> (i32, i32) {
    %c0_i32 = arith.constant 0 : i32
    %c0_i32_0 = arith.constant 0 : i32
    return %arg0, %c0_i32 : i32, i32
  }
  func.func @transform_1(%arg0: i32) -> (i32, i32) {
    %c0_i32 = arith.constant 0 : i32
    %c0_i32_0 = arith.constant 0 : i32
    return %arg0, %c0_i32 : i32, i32
  }
  func.func @transform_2(%arg0: i32) -> (i32, i32) {
    %c0_i32 = arith.constant 0 : i32
    %c0_i32_0 = arith.constant 0 : i32
    %c0_i32_1 = arith.constant 0 : i32
    return %c0_i32, %c0_i32_0 : i32, i32
  }
  func.func @transform_3(%arg0: i32) -> (i32, i32) {
    %c0_i32 = arith.constant 0 : i32
    %c0_i32_0 = arith.constant 0 : i32
    %c0_i32_1 = arith.constant 0 : i32
    return %c0_i32, %c0_i32_0 : i32, i32
  }
  func.func @transform_4(%arg0: i32) -> (i32, i32) {
    %c0_i32 = arith.constant 0 : i32
    %c0_i32_0 = arith.constant 0 : i32
    %c0_i32_1 = arith.constant 0 : i32
    return %c0_i32, %c0_i32_0 : i32, i32
  }
  func.func @transform_5(%arg0: i32) -> (i32, i32) {
    %c0_i32 = arith.constant 0 : i32
    %c0_i32_0 = arith.constant 0 : i32
    return %arg0, %c0_i32 : i32, i32
  }
}

</mosaic_0001>

<llo_original>
// kernel: _run.1
$region0: #{_run.1}
  #allocation0 [shape = 'u32[]', space=smem, size = 0x4, offset = 0x4, fixed_abs, tag = 'smem constant byte address 0x4 - core index']
  #allocation1 [shape = 'u32[144,128]{1,0:T(1,128)}', space=vmem, size = 0x12000, scoped, tag = 'internal scratch']
  %s0 = inlined_call_operand.vmem [shape: bf16[8,48], index: 0, kind: input, shape index: {}]
  %s1 = inlined_call_operand.vmem [shape: bf16[8,16], index: 1, kind: input, shape index: {}]
  %s2 = inlined_call_operand.vmem [shape: bf16[48,128], index: 2, kind: input, shape index: {}]
  %s3 = inlined_call_operand.vmem [shape: bf16[16,128], index: 3, kind: input, shape index: {}]
  %s4 = inlined_call_operand.vmem [shape: f32[1,128], index: 4, kind: input, shape index: {}]
  %s5 = inlined_call_operand.hbm [shape: f32[8,128], index: 5, kind: output, shape index: {}]
  %s6 = sld [smem:[#allocation0]]
  $region30: #{_run.1} parent=0
    _
  %s8 = ssub.s32 1, %s6
  %s9 = scalar_select 0, %s8, %s6
  $region1: #{_run.1} parent=0
    #allocation2 [shape = 'u8[4096]{0}', space=vmem, size = 0x1000, scoped, tag = 'output window, operand 0, single buffered']
    #allocation3 [shape = 's32[1]{0}', space=sflag, size = 0x4, scoped, tag = 'scoped memory for _run.1']
    %10 = vsyncpa [#allocation3], 0
    // Predicated region
    $region2: #{_run.1} parent=1 // pred_check
      _
    $region3: #{_run.1} parent=1 // pred_check_branch
      %12 = sbr.rel (0) target = $region5
    $region4: #{_run.1} parent=1 // pred_region
      _
    $region5: #{_run.1} parent=1 // pred_fallthru
      _
    // Predicated region
    $region6: #{_run.1} parent=1 // pred_check
      _
    $region7: #{_run.1} parent=1 // pred_check_branch
      %14 = sbr.rel (0) target = $region9
    $region8: #{_run.1} parent=1 // pred_region
      _
    $region9: #{_run.1} parent=1 // pred_fallthru
      _
    // Predicated region
    $region10: #{_run.1} parent=1 // pred_check
      _
    $region11: #{_run.1} parent=1 // pred_check_branch
      %16 = sbr.rel (0) target = $region13
    $region12: #{_run.1} parent=1 // pred_region
      _
    $region13: #{_run.1} parent=1 // pred_fallthru
      _
    // Predicated region
    $region14: #{_run.1} parent=1 // pred_check
      _
    $region15: #{_run.1} parent=1 // pred_check_branch
      %18 = sbr.rel (0) target = $region17
    $region16: #{_run.1} parent=1 // pred_region
      _
    $region17: #{_run.1} parent=1 // pred_fallthru
      _
    // Predicated region
    $region18: #{_run.1} parent=1 // pred_check
      _
    $region19: #{_run.1} parent=1 // pred_check_branch
      %20 = sbr.rel (0) target = $region21
    $region20: #{_run.1} parent=1 // pred_region
      _
    $region21: #{_run.1} parent=1 // pred_fallthru
      _
    %v22 = vld [vmem:[%s0] sm:$0xf]
    %v23 = vld [vmem:[%s2] sm:$0xf]
    %v24 = vld [vmem:[%s2 + $0x4] sm:$0xf]
    %v25 = vld [vmem:[%s2 + $0x8] sm:$0xf]
    %v26 = vld [vmem:[%s2 + $0xc] sm:$0xf]
    %v27 = vld [vmem:[%s2 + $0x10] sm:$0xf]
    %v28 = vld [vmem:[%s2 + $0x14] sm:$0xf]
    %v29 = vld [vmem:[%s1] sm:$0xf]
    %v30 = vld [vmem:[%s3] sm:$0xf]
    %v31 = vld [vmem:[%s3 + $0x4] sm:$0xf]
    %v34 = vunpack.c.l.b16 %v30
    %v35 = vunpack.c.l.b16 %v31
    %v36 = vpack.c.b16 %v35, %v34
    %vm38 = vcmask 130048
    %v40 = vsel %vm38, %v29, 0
    %42 = vmatprep.subr.bf16.mxu0 0
    %43 = vmatpush1.bf16.msra.mxu0 %v36
    %44 = vmatprep.subr.bf16.mxu0 0
    %45 = vmatpush1.bf16.msra.mxu0 0
    %46 = vmatprep.subr.bf16.mxu0 0
    %47 = vmatpush1.bf16.msra.mxu0 0
    %48 = vmatprep.subr.bf16.mxu0 0
    %49 = vmatpush1.bf16.msra.mxu0 0
    %50 = vmatprep.subr.bf16.mxu0 0
    %51 = vmatpush1.bf16.msra.mxu0 0
    %52 = vmatprep.subr.bf16.mxu0 0
    %53 = vmatpush1.bf16.msra.mxu0 0
    %54 = vmatprep.subr.bf16.mxu0 0
    %55 = vmatpush1.bf16.msra.mxu0 0
    %56 = vmatprep.subr.bf16.mxu0 0
    %57 = vmatpush1.bf16.msra.mxu0 0
    %58 = vmatprep.subr.bf16.mxu0 0
    %59 = vmatpush1.bf16.msra.mxu0 0
    %60 = vmatprep.subr.bf16.mxu0 0
    %61 = vmatpush1.bf16.msra.mxu0 0
    %62 = vmatprep.subr.bf16.mxu0 0
    %63 = vmatpush1.bf16.msra.mxu0 0
    %64 = vmatprep.subr.bf16.mxu0 0
    %65 = vmatpush1.bf16.msra.mxu0 0
    %66 = vmatprep.subr.bf16.mxu0 0
    %67 = vmatpush1.bf16.msra.mxu0 0
    %68 = vmatprep.subr.bf16.mxu0 0
    %69 = vmatpush1.bf16.msra.mxu0 0
    %70 = vmatprep.subr.bf16.mxu0 0
    %71 = vmatpush1.bf16.msra.mxu0 0
    %72 = vmatprep.subr.bf16.mxu0 0
    %73 = vmatpush1.bf16.msra.mxu0 0
    %74 = vmatprep.mubr.bf16.mxu0 0
    %75 = vmatmul.mubr.bf16.gmra.mrb[0].mxu0 %v40
    %v76 = vpop.f32.mrb[0].mxu0
    %v77 = vadd.f32 0.0, %v76
    %v78 = vpop.f32.mrb[0].mxu0
    %v79 = vpop.f32.mrb[0].mxu0
    %v80 = vpop.f32.mrb[0].mxu0
    %81 = vdwg.mxu0
    %v88 = vunpack.c.l.b16 %v23
    %v89 = vunpack.c.l.b16 %v24
    %v90 = vunpack.c.l.b16 %v25
    %v91 = vunpack.c.l.b16 %v26
    %v92 = vunpack.c.l.b16 %v27
    %v93 = vunpack.c.l.b16 %v28
    %v94 = vpack.c.b16 %v89, %v88
    %v95 = vpack.c.b16 %v91, %v90
    %v96 = vpack.c.b16 %v93, %v92
    %vm100 = vcmask 392192
    %v102 = vsel %vm100, %v22, 0
    %104 = vmatprep.subr.bf16.mxu0 0
    %105 = vmatpush1.bf16.msra.mxu0 %v94
    %106 = vmatprep.subr.bf16.mxu0 0
    %107 = vmatpush1.bf16.msra.mxu0 %v95
    %108 = vmatprep.subr.bf16.mxu0 0
    %109 = vmatpush1.bf16.msra.mxu0 %v96
    %110 = vmatprep.subr.bf16.mxu0 0
    %111 = vmatpush1.bf16.msra.mxu0 0
    %112 = vmatprep.subr.bf16.mxu0 0
    %113 = vmatpush1.bf16.msra.mxu0 0
    %114 = vmatprep.subr.bf16.mxu0 0
    %115 = vmatpush1.bf16.msra.mxu0 0
    %116 = vmatprep.subr.bf16.mxu0 0
    %117 = vmatpush1.bf16.msra.mxu0 0
    %118 = vmatprep.subr.bf16.mxu0 0
    %119 = vmatpush1.bf16.msra.mxu0 0
    %120 = vmatprep.subr.bf16.mxu0 0
    %121 = vmatpush1.bf16.msra.mxu0 0
    %122 = vmatprep.subr.bf16.mxu0 0
    %123 = vmatpush1.bf16.msra.mxu0 0
    %124 = vmatprep.subr.bf16.mxu0 0
    %125 = vmatpush1.bf16.msra.mxu0 0
    %126 = vmatprep.subr.bf16.mxu0 0
    %127 = vmatpush1.bf16.msra.mxu0 0
    %128 = vmatprep.subr.bf16.mxu0 0
    %129 = vmatpush1.bf16.msra.mxu0 0
    %130 = vmatprep.subr.bf16.mxu0 0
    %131 = vmatpush1.bf16.msra.mxu0 0
    %132 = vmatprep.subr.bf16.mxu0 0
    %133 = vmatpush1.bf16.msra.mxu0 0
    %134 = vmatprep.subr.bf16.mxu0 0
    %135 = vmatpush1.bf16.msra.mxu0 0
    %136 = vmatprep.mubr.bf16.mxu0 0
    %137 = vmatmul.mubr.bf16.gmra.mrb[0].mxu0 %v102
    %v138 = vpop.f32.mrb[0].mxu0
    %v139 = vadd.f32 %v77, %v138
    %v140 = vpop.f32.mrb[0].mxu0
    %v141 = vpop.f32.mrb[0].mxu0
    %v142 = vpop.f32.mrb[0].mxu0
    %143 = vdwg.mxu0
    %v144 = vld [vmem:[%s4] sm:$0x1]
    %v146 = vlaneseq
    %v147 = vshrl.u32 %v146, 7
    %v148 = vsub.s32 0, %v147
    %v149 = vrot.slane %v144, %v148
    %v151 = vadd.f32 %v139, %v149
    %152 = vst [vmem:[#allocation2] sm:$0xff] %v151
    // Predicated region
    $region22: #{_run.1} parent=1 // pred_check
      _
    $region23: #{_run.1} parent=1 // pred_check_branch
      %154 = sbr.rel (0) target = $region25
    $region24: #{_run.1} parent=1 // pred_region
      %s156 = ssub.s32 128, 128
      %157 = vsyncadd [#allocation3], %s156
      %s159 = sshll.u32 [#allocation2], 4
      %s160 = int_to_ptr.vmem [resolvable:$true] %s159
      %162 = dma.vmem_to_hbm [thread:$0]  %s160, 128, %s5, [#allocation3]
    $region25: #{_run.1} parent=1 // pred_fallthru
      _
    // Predicated region
    $region26: #{_run.1} parent=1 // pred_check
      _
    $region27: #{_run.1} parent=1 // pred_check_branch
      %164 = sbr.rel (0) target = $region29
    $region28: #{_run.1} parent=1 // pred_region
      %165 = dma.done [#allocation3], 128
    $region29: #{_run.1} parent=1 // pred_fallthru
      _
    %166 = vsyncpa [#allocation3], 1

</llo_original>
